<compile_context>
chip_gen: v5e
topology: v5e:2x2
jax: 0.10.0
libtpu: 0.0.40
codegen_flags: <defaults>
</compile_context>

<pallas_src>
import functools

import jax
import jax.numpy as jnp
from jax.experimental import pallas as pl
from jax.experimental.pallas import tpu as pltpu


def _label_smoothing_kernel(pred_ref, tgt_ref, out_ref, *,
                            confidence, off_value, n_rows):
    """One row-tile of the fused smoothed-CE loss; writes one partial sum.

    pred_ref: [T, C] (f32 or bf16) in VMEM
    tgt_ref : [T, 1] int32 in VMEM
    out_ref : [1, 1] f32 in SMEM (grid-indexed per-block partial sum)
    """
    i = pl.program_id(0)

    pred = pred_ref[...].astype(jnp.float32)                 # [T, C]
    t, c = pred.shape

    # Numerically stable log-softmax pieces (no logp materialization).
    m = jnp.max(pred, axis=-1, keepdims=True)                 # [T, 1]
    shifted = pred - m                                         # [T, C]
    lse = jnp.log(jnp.sum(jnp.exp(shifted), axis=-1, keepdims=True))  # [T, 1]

    # Fused target gather + full-row sum: one select, one mul, one reduction.
    #   w[j]     = confidence at the target column, off_value elsewhere
    #   loss_row = -sum_j w[j]*(shifted[j] - lse)
    #            = coef_lse*lse - sum_j w[j]*shifted[j]
    #   coef_lse = sum_j w[j] = (confidence - off_value) + off_value*C
    col = jax.lax.broadcasted_iota(jnp.int32, (t, c), 1)       # [T, C]
    tgt = tgt_ref[...]                                          # [T, 1] int32
    w = jnp.where(col == tgt, jnp.float32(confidence), jnp.float32(off_value))
    weighted = jnp.sum(w * shifted, axis=-1, keepdims=True)     # [T, 1]

    coef_lse = (confidence - off_value) + off_value * c         # == 1.0 iff classes == C
    per_row = jnp.float32(coef_lse) * lse - weighted            # [T, 1]

    # Mask rows past the true batch size (partial last tile).  Keep this a
    # select (NOT a multiply) so NaN/Inf in padding rows cannot leak.
    row_ids = i * t + jax.lax.broadcasted_iota(jnp.int32, (t, 1), 0)
    per_row = jnp.where(row_ids < n_rows, per_row, 0.0)

    out_ref[0, 0] = jnp.sum(per_row)


def _vmem_limit_bytes():
    """Generation-aware VMEM limit (v5e/v6e: 128 MiB physical, v7x: 64 MiB)."""
    cap = None
    try:
        cap = getattr(pltpu.get_tpu_info(), "vmem_capacity_bytes", None)
    except Exception:
        cap = None
    if not cap:
        cap = 64 * 1024 * 1024          # conservative: assume v7x-sized VMEM
    return min(int(cap * 3 // 4), 100 * 1024 * 1024)


def _choose_tile_n(n, c, itemsize, vmem_limit_bytes):
    """Largest row tile whose total VMEM footprint fits comfortably.

    Footprint per row: double-buffered pred input (2 * itemsize * C) plus the
    in-register/VMEM f32 expansion (shifted / exp / weighted temporaries,
    budgeted conservatively at 3 * 4 * C; the compiler usually fuses some).
    """
    bytes_per_row = c * (2 * itemsize + 12)
    usable = int(vmem_limit_bytes * 0.6)     # headroom for target tiles / spills
    raw = usable // max(1, bytes_per_row)
    if raw >= n:
        return n                              # single block == full dim
    align = 16 if itemsize == 2 else 8        # bf16 packs 16 sublanes per vreg
    rows = (raw // align) * align
    if rows < 8:
        rows = (raw // 8) * 8
    if rows < 8:
        # TODO(synk): class-tiled variant for vocab-scale C (see header).
        raise ValueError(
            f"classes={c} too large for a full-class row tile within "
            f"{vmem_limit_bytes} bytes of VMEM")
    return rows


def label_smoothing_loss(pred, target, *, classes, smoothing=0.1, tile_n=None):
    """pred: [N, C] float (f32 or bf16), target: [N] int.  Returns scalar f32."""
    if classes < 2:
        raise ValueError("classes must be >= 2 for label smoothing "
                         "(smoothing/(classes-1) is undefined otherwise)")
    confidence = 1.0 - smoothing
    off_value = smoothing / (classes - 1)

    n, c = pred.shape
    tgt2d = target.astype(jnp.int32).reshape(n, 1)
    itemsize = jnp.dtype(pred.dtype).itemsize

    vmem_limit = _vmem_limit_bytes()
    if tile_n is None:
        tile_n = _choose_tile_n(n, c, itemsize, vmem_limit)
    else:
        align = 16 if itemsize == 2 else 8
        tile_n = n if tile_n >= n else max(align, (tile_n // align) * align)

    num_blocks = pl.cdiv(n, tile_n)

    kernel = functools.partial(
        _label_smoothing_kernel,
        confidence=confidence, off_value=off_value, n_rows=n,
    )

    partials = pl.pallas_call(
        kernel,
        out_shape=jax.ShapeDtypeStruct((num_blocks, 1), jnp.float32),
        grid_spec=pltpu.PrefetchScalarGridSpec(
            num_scalar_prefetch=0,
            grid=(num_blocks,),
            in_specs=[
                pl.BlockSpec((tile_n, c), lambda i: (i, 0)),   # pred row tile
                pl.BlockSpec((tile_n, 1), lambda i: (i, 0)),   # target row tile
            ],
            # One partial sum per grid step (grid-indexed output -> the grid
            # axis is truly parallel; both v7x TensorCores can split it).
            out_specs=pl.BlockSpec((1, 1), lambda i: (i, 0),
                                   memory_space=pltpu.SMEM),
        ),
        compiler_params=pltpu.CompilerParams(
            dimension_semantics=("parallel",),
            vmem_limit_bytes=vmem_limit,
        ),
    )(pred, tgt2d)

    # Final reduction + mean over the tiny partials array in JAX.
    return jnp.sum(partials) / jnp.float32(n)


def _reference(pred, target, *, classes, smoothing=0.1):
    confidence = 1.0 - smoothing
    logp = jax.nn.log_softmax(pred.astype(jnp.float32), axis=-1)
    true_dist = jnp.full_like(logp, smoothing / (classes - 1))
    true_dist = true_dist.at[jnp.arange(pred.shape[0]), target].set(confidence)
    return jnp.mean(jnp.sum(-true_dist * logp, axis=-1))


if __name__ == "__main__":
    smoothing = 0.1
    k1, k2, k3, k4, k5, k6 = jax.random.split(jax.random.PRNGKey(0), 6)

    # Test 1: f32 pred, batch=8, C=32, auto tile (single-block path).
    C = 32
    pred = jax.random.normal(k1, (8, C), dtype=jnp.float32)
    target = jax.random.randint(k2, (8,), 0, C, dtype=jnp.int32)
    loss = jax.block_until_ready(
        label_smoothing_loss(pred, target, classes=C, smoothing=smoothing))
    ref = _reference(pred, target, classes=C, smoothing=smoothing)
    assert jnp.allclose(loss, ref, atol=1e-5, rtol=1e-5), (loss, ref)

    # Test 2: bf16 pred, batch=20, tile_n=8 -> rounded to 16 (bf16 packing),
    # 2 grid steps, masked partial last tile, parallel partials.
    pred2 = jax.random.normal(k3, (20, C), dtype=jnp.float32).astype(jnp.bfloat16)
    target2 = jax.random.randint(k4, (20,), 0, C, dtype=jnp.int32)
    loss2 = jax.block_until_ready(
        label_smoothing_loss(pred2, target2, classes=C, smoothing=smoothing,
                             tile_n=8))
    ref2 = _reference(pred2.astype(jnp.float32), target2, classes=C,
                      smoothing=smoothing)
    assert jnp.allclose(loss2, ref2, atol=1e-4, rtol=1e-5), (loss2, ref2)

    # Test 3: f32 pred, batch=100, C=128 (full lane width), tile_n=32 ->
    # 4 grid steps with a masked partial last tile.
    C3 = 128
    pred3 = jax.random.normal(k5, (100, C3), dtype=jnp.float32)
    target3 = jax.random.randint(k6, (100,), 0, C3, dtype=jnp.int32)
    loss3 = jax.block_until_ready(
        label_smoothing_loss(pred3, target3, classes=C3, smoothing=smoothing,
                             tile_n=32))
    ref3 = _reference(pred3, target3, classes=C3, smoothing=smoothing)
    assert jnp.allclose(loss3, ref3, atol=1e-5, rtol=1e-5), (loss3, ref3)

    print("KERNEL_OK")
</pallas_src>

<mosaic_0001>
module attributes {stable_mosaic.version = 11 : i64} {
  func.func @_label_smoothing_kernel(%arg0: i32, %arg1: memref<8x32xf32, #tpu.memory_space<vmem>>, %arg2: memref<8x1xi32, #tpu.memory_space<vmem>>, %arg3: memref<1x1xf32, #tpu.memory_space<smem>>) attributes {dimension_semantics = [#tpu.dimension_semantics<parallel>], iteration_bounds = array<i64: 1>, scalar_prefetch = 0 : i64, scratch_operands = 0 : i64, tpu.core_type = #tpu.core_type<tc>, window_params = [{transform_indices = @transform_0, window_bounds = array<i64: 8, 32>}, {transform_indices = @transform_1, window_bounds = array<i64: 8, 1>}, {transform_indices = @transform_2, window_bounds = array<i64: 1, 1>}]} {
    %c0 = arith.constant 0 : index
    %c0_0 = arith.constant 0 : index
    %0 = vector.load %arg1[%c0, %c0_0] : memref<8x32xf32, #tpu.memory_space<vmem>>, vector<8x32xf32>
    %cst = arith.constant dense<0xFF800000> : vector<8xf32>
    %1 = vector.multi_reduction <maximumf>, %0, %cst [1] : vector<8x32xf32> to vector<8xf32>
    %2 = vector.shape_cast %1 : vector<8xf32> to vector<8x1xf32>
    %3 = vector.broadcast %2 : vector<8x1xf32> to vector<8x32xf32>
    %4 = arith.subf %0, %3 : vector<8x32xf32>
    %5 = math.exp %4 : vector<8x32xf32>
    %cst_1 = arith.constant dense<0.000000e+00> : vector<8xf32>
    %6 = vector.multi_reduction <add>, %5, %cst_1 [1] : vector<8x32xf32> to vector<8xf32>
    %7 = vector.shape_cast %6 : vector<8xf32> to vector<8x1xf32>
    %8 = math.log %7 : vector<8x1xf32>
    %9 = tpu.iota {dimensions = array<i32: 1>} : vector<8x32xi32>
    %c0_2 = arith.constant 0 : index
    %c0_3 = arith.constant 0 : index
    %10 = vector.load %arg2[%c0_2, %c0_3] : memref<8x1xi32, #tpu.memory_space<vmem>>, vector<8x1xi32>
    %11 = vector.broadcast %10 : vector<8x1xi32> to vector<8x32xi32>
    %12 = arith.cmpi eq, %9, %11 : vector<8x32xi32>
    %cst_4 = arith.constant 0.899999976 : f32
    %cst_5 = arith.constant 0.0032258064 : f32
    %13 = vector.broadcast %cst_4 : f32 to vector<8x32xf32>
    %14 = vector.broadcast %cst_5 : f32 to vector<8x32xf32>
    %15 = arith.select %12, %13, %14 : vector<8x32xi1>, vector<8x32xf32>
    %16 = arith.mulf %15, %4 : vector<8x32xf32>
    %cst_6 = arith.constant dense<0.000000e+00> : vector<8xf32>
    %17 = vector.multi_reduction <add>, %16, %cst_6 [1] : vector<8x32xf32> to vector<8xf32>
    %18 = vector.shape_cast %17 : vector<8xf32> to vector<8x1xf32>
    %cst_7 = arith.constant 1.000000e+00 : f32
    %19 = vector.broadcast %cst_7 : f32 to vector<8x1xf32>
    %20 = arith.mulf %19, %8 : vector<8x1xf32>
    %21 = arith.subf %20, %18 : vector<8x1xf32>
    %c8_i32 = arith.constant 8 : i32
    %22 = arith.muli %arg0, %c8_i32 : i32
    %23 = tpu.iota {dimensions = array<i32: 0>} : vector<8x1xi32>
    %24 = vector.broadcast %22 : i32 to vector<8x1xi32>
    %25 = arith.addi %24, %23 : vector<8x1xi32>
    %c8_i32_8 = arith.constant 8 : i32
    %26 = vector.broadcast %c8_i32_8 : i32 to vector<8x1xi32>
    %27 = arith.cmpi slt, %25, %26 : vector<8x1xi32>
    %cst_9 = arith.constant 0.000000e+00 : f32
    %28 = vector.broadcast %cst_9 : f32 to vector<8x1xf32>
    %29 = arith.select %27, %21, %28 : vector<8x1xi1>, vector<8x1xf32>
    %30 = vector.shape_cast %29 : vector<8x1xf32> to vector<1x8x1xf32>
    %cst_10 = arith.constant dense<0.000000e+00> : vector<1xf32>
    %31 = vector.multi_reduction <add>, %30, %cst_10 [1, 2] : vector<1x8x1xf32> to vector<1xf32>
    %32 = vector.shape_cast %31 : vector<1xf32> to vector<1x1x1xf32>
    %33 = vector.extract %32[0, 0, 0] : f32 from vector<1x1x1xf32>
    %c0_11 = arith.constant 0 : index
    %c0_12 = arith.constant 0 : index
    %34 = memref.load %arg3[%c0_11, %c0_12] : memref<1x1xf32, #tpu.memory_space<smem>>
    memref.store %33, %arg3[%c0_11, %c0_12] : memref<1x1xf32, #tpu.memory_space<smem>>
    return
  }
  func.func @transform_0(%arg0: i32) -> (i32, i32) {
    %c0_i32 = arith.constant 0 : i32
    %c0_i32_0 = arith.constant 0 : i32
    return %arg0, %c0_i32 : i32, i32
  }
  func.func @transform_1(%arg0: i32) -> (i32, i32) {
    %c0_i32 = arith.constant 0 : i32
    %c0_i32_0 = arith.constant 0 : i32
    return %arg0, %c0_i32 : i32, i32
  }
  func.func @transform_2(%arg0: i32) -> (i32, i32) {
    %c0_i32 = arith.constant 0 : i32
    %c0_i32_0 = arith.constant 0 : i32
    return %arg0, %c0_i32 : i32, i32
  }
}

</mosaic_0001>

<llo_original>
// kernel: tpu_custom_call.1
$region0: #{tpu_custom_call.1}
  #allocation0 [shape = 'u32[]', space=smem, size = 0x4, offset = 0x4, fixed_abs, tag = 'smem constant byte address 0x4 - core index']
  #allocation1 [shape = 'u32[72,128]{1,0:T(1,128)}', space=vmem, size = 0x9000, scoped, tag = 'internal scratch']
  %s0 = inlined_call_operand.vmem [shape: f32[8,32], index: 0, kind: input, shape index: {}]
  %s1 = inlined_call_operand.vmem [shape: s32[8,1], index: 1, kind: input, shape index: {}]
  %s2 = inlined_call_operand.hbm [shape: f32[1,1], index: 2, kind: output, shape index: {}]
  %s3 = sld [smem:[#allocation0]]
  $region18: #{tpu_custom_call.1} parent=0
    _
  %s5 = ssub.s32 1, %s3
  %s6 = scalar_select 0, %s5, %s3
  $region1: #{tpu_custom_call.1} parent=0
    #allocation2 [shape = 'u8[512]{0}', space=smem, size = 0x200, scoped, tag = 'output window, operand 0, single buffered']
    #allocation3 [shape = 's32[1]{0}', space=sflag, size = 0x4, scoped, tag = 'scoped memory for tpu_custom_call.1']
    %7 = vsyncpa [#allocation3], 0
    // Predicated region
    $region2: #{tpu_custom_call.1} parent=1 // pred_check
      _
    $region3: #{tpu_custom_call.1} parent=1 // pred_check_branch
      %9 = sbr.rel (0) target = $region5
    $region4: #{tpu_custom_call.1} parent=1 // pred_region
      _
    $region5: #{tpu_custom_call.1} parent=1 // pred_fallthru
      _
    // Predicated region
    $region6: #{tpu_custom_call.1} parent=1 // pred_check
      _
    $region7: #{tpu_custom_call.1} parent=1 // pred_check_branch
      %11 = sbr.rel (0) target = $region9
    $region8: #{tpu_custom_call.1} parent=1 // pred_region
      _
    $region9: #{tpu_custom_call.1} parent=1 // pred_fallthru
      _
    %v12 = vld [vmem:[%s0] sm:$0xff]
    %vm13 = vcmask 261120
    %v14 = vsel %vm13, %v12, -inf
    %15 = vmax.xlane.f32.xlu0 %v14
    %v16 = vpop.xlane.xlu0 %15
    %v17 = vsub.f32 %v12, %v16
    %v18 = vmul.f32 %v17, 1.442695
    %v19 = vpow.pop %v18
    %v20 = vsel %vm13, %v19, 0.0
    %21 = vadd.xlane.f32.xlu0 %v20
    %v22 = vpop.xlane.xlu0 %21
    %v23 = vlog2.pop %v22
    %v24 = vmul.f32 %v23, 0.6931472
    %v25 = vlaneseq
    %v26 = vand.u32 %v25, 127
    %v27 = vld [vmem:[%s1] sm:$0xff]
    %28 = vset.pattern.permute.xlu0 0
    %29 = vperm.xlu0 %28, %v27
    %v30 = vpop.permute.xlu0 %29
    %vm31 = vcmp.eq.s32.totalorder %v26, %v30
    %v32 = vsel %vm31, 0.9, 0.0032258064
    %v33 = vmul.f32 %v32, %v17
    %v34 = vsel %vm13, %v33, 0.0
    %35 = vadd.xlane.f32.xlu0 %v34
    %v36 = vpop.xlane.xlu0 %35
    %v37 = vsub.f32 %v24, %v36
    %s38 = smul.u32 0, 8
    %v39 = vlaneseq
    %v40 = vshrl.u32 %v39, 7
    %v41 = vstv %s38
    %v42 = vadd.s32 %v41, %v40
    %vm43 = vcmp.lt.s32.totalorder %v42, 8
    %v44 = vsel %vm43, %v37, 0.0
    %vm45 = vcmask 7168
    %v46 = vsel %vm45, %v44, 0.0
    %47 = vadd.xlane.f32.xlu0 %v46
    %v48 = vpop.xlane.xlu0 %47
    %v49 = vrot.slane %v48, 4
    %v50 = vadd.f32 %v48, %v49
    %v51 = vrot.slane %v50, 2
    %v52 = vadd.f32 %v50, %v51
    %v53 = vrot.slane %v52, 1
    %v54 = vadd.f32 %v52, %v53
    %s55 = vtos %v54
    %s56 = scalar_lea.smem [#allocation2], 0
    %57 = sst [smem:[%s56]] %s55
    // Predicated region
    $region10: #{tpu_custom_call.1} parent=1 // pred_check
      _
    $region11: #{tpu_custom_call.1} parent=1 // pred_check_branch
      %59 = sbr.rel (0) target = $region13
    $region12: #{tpu_custom_call.1} parent=1 // pred_region
      %61 = vsyncadd [#allocation3], 0
      %s63 = sshll.u32 %s2, 4
      %s64 = int_to_ptr.hbm [resolvable:$true] %s63
      %66 = dma.smem_to_hbm [#allocation2], 16, %s64, [#allocation3]
    $region13: #{tpu_custom_call.1} parent=1 // pred_fallthru
      _
    // Predicated region
    $region14: #{tpu_custom_call.1} parent=1 // pred_check
      _
    $region15: #{tpu_custom_call.1} parent=1 // pred_check_branch
      %68 = sbr.rel (0) target = $region17
    $region16: #{tpu_custom_call.1} parent=1 // pred_region
      %70 = dma.done [#allocation3], 16
    $region17: #{tpu_custom_call.1} parent=1 // pred_fallthru
      _
    %71 = sfence
    %72 = vsyncpa [#allocation3], 1

</llo_original>
